<compile_context>
chip_gen: v7x
topology: tpu7x:2x2x1
jax: 0.10.0
libtpu: 0.0.40
codegen_flags: <defaults>
</compile_context>

<pallas_src>
import functools

import numpy as np
import jax
import jax.numpy as jnp
from jax import lax
from jax.experimental import pallas as pl
from jax.experimental.pallas import tpu as pltpu


def _round_up(x, m):
    return ((x + m - 1) // m) * m


def _choose_time_tile(T, B_pad):
    # Keep one (7, B_pad, tT) f32 block at <= ~4 MiB so the double-buffered input
    # stream (y + packed targets) stays ~<9 MiB total -> fits the smallest scoped
    # VMEM default (16 MiB on v5e) and leaves headroom on v7x (64 MiB physical).
    budget_bytes = 4 * 1024 * 1024
    tT = budget_bytes // (7 * B_pad * 4)
    tT = max(128, (tT // 128) * 128)
    tT = min(tT, 2048)
    tT = min(tT, _round_up(max(T, 1), 128))
    return tT


def _tuv_ce_kernel(lens_ref, y_ref, code_ref, out_ref):
    """Per-time-tile masked cross-entropy partial sums.

    lens_ref: (B_pad, 1)     int32  valid length per batch row (0 for padded rows)
    y_ref:    (7, B_pad, tT) f32    logits, channel-major, time on lanes
    code_ref: (B_pad, tT)    int32  packed targets: bits[0:2]=turn, bit2=utt, bit3=vad
    out_ref:  (B_pad, 128)   f32    per-batch partial CE sum for this time tile
                                    (broadcast across lanes; wrapper reads lane 0)
    """
    tile = pl.program_id(0)
    B_pad = y_ref.shape[1]
    tT = y_ref.shape[2]

    lens = lens_ref[...]                                            # (B_pad, 1)
    t_idx = tile * tT + lax.broadcasted_iota(jnp.int32, (B_pad, tT), 1)
    maskf = (t_idx < lens).astype(jnp.float32)                      # (B_pad, tT)

    code = code_ref[...]
    t_turn = code & 3
    t_utt = (code >> 2) & 1
    t_vad = (code >> 3) & 1

    l0, l1, l2 = y_ref[0], y_ref[1], y_ref[2]
    l3, l4 = y_ref[3], y_ref[4]
    l5, l6 = y_ref[5], y_ref[6]

    # --- 3-class head (turn): CE = hi + log(sum exp(l - hi)) - l_sel ----------
    # Exact 3-way sort via min/max (cheap VPU) lets us drop one exp: the largest
    # term of the logsumexp is exactly exp(0) = 1.
    hi = jnp.maximum(jnp.maximum(l0, l1), l2)
    lo = jnp.minimum(jnp.minimum(l0, l1), l2)
    mid = jnp.maximum(jnp.minimum(l0, l1), jnp.minimum(jnp.maximum(l0, l1), l2))
    s_turn = 1.0 + jnp.exp(mid - hi) + jnp.exp(lo - hi)            # in (1, 3]
    sel3 = jnp.where(t_turn == 0, l0, jnp.where(t_turn == 1, l1, l2))

    # --- 2-class heads: CE = softplus(l_other - l_sel) ------------------------
    #   softplus(x) = max(x, 0) + log(1 + exp(-|x|))
    # Keep the log factor symbolic so all three heads share one fused EUP log.
    def head2(la, lb, tgt):
        d = jnp.where(tgt == 0, la - lb, lb - la)                   # l_sel - l_other
        lin = jnp.maximum(-d, 0.0)
        s = 1.0 + jnp.exp(-jnp.abs(d))                              # in (1, 2]
        return lin, s

    lin_u, s_u = head2(l3, l4, t_utt)
    lin_v, s_v = head2(l5, l6, t_vad)

    # Single log for all three heads (product in (1, 12] -> f32-safe).
    per = (hi - sel3) + lin_u + lin_v + jnp.log(s_turn * s_u * s_v)
    per = per * maskf                                               # (B_pad, tT)

    s = jnp.sum(per, axis=1, keepdims=True)                         # (B_pad, 1)
    out_ref[...] = jnp.broadcast_to(s, (B_pad, 128))


@functools.partial(jax.jit, static_argnames=("time_tile",))
def turn_utterance_vad_ce_loss(y, t, y_len, *, time_tile=None):
    """y: (T, B, 7) float, t: (T, B, 3) int, y_len: (B,) int -> scalar f32."""
    T, B, C = y.shape
    assert C == 7 and t.shape == (T, B, 3)

    B_pad = _round_up(B, 8)
    if time_tile is None:
        tT = _choose_time_tile(T, B_pad)
    else:
        assert time_tile > 0 and time_tile % 128 == 0
        tT = int(time_tile)
    T_pad = _round_up(max(T, 1), tT)
    n_tiles = T_pad // tT

    # Single fused cast+transpose pass: channel-major with time on the lane dim.
    y_cbt = jnp.transpose(y.astype(jnp.float32), (2, 1, 0))                 # (7, B, T)
    # Pack the 3 target heads into one int32 code per (b, t) -> 3x less target traffic.
    t32 = t.astype(jnp.int32)
    code_bt = (t32[..., 0] | (t32[..., 1] << 2) | (t32[..., 2] << 3)).T     # (B, T)

    # Pad batch to a multiple of 8 (sublanes) and time to a multiple of tT (lanes).
    # Padded rows get y_len=0 and padded steps have t_idx >= len -> fully masked.
    y_cbt = jnp.pad(y_cbt, ((0, 0), (0, B_pad - B), (0, T_pad - T)))
    code_bt = jnp.pad(code_bt, ((0, B_pad - B), (0, T_pad - T)))
    lens = jnp.pad(y_len.astype(jnp.int32), (0, B_pad - B)).reshape(B_pad, 1)

    out = pl.pallas_call(
        _tuv_ce_kernel,
        out_shape=jax.ShapeDtypeStruct((n_tiles * B_pad, 128), jnp.float32),
        grid=(n_tiles,),
        in_specs=[
            pl.BlockSpec((B_pad, 1), lambda i: (0, 0)),          # lens (resident)
            pl.BlockSpec((7, B_pad, tT), lambda i: (0, 0, i)),   # logits tile
            pl.BlockSpec((B_pad, tT), lambda i: (0, i)),         # packed targets tile
        ],
        out_specs=pl.BlockSpec((B_pad, 128), lambda i: (i, 0)),  # per-tile partials
        compiler_params=pltpu.CompilerParams(
            dimension_semantics=("parallel",)),
    )(lens, y_cbt, code_bt)

    # Finalize in plain JAX (tiny): sum tiles, mean over L_i, divide by batch size B
    # (matches the PyTorch module: denominator is B even if some rows are skipped).
    per_b_sum = out.reshape(n_tiles, B_pad, 128)[:, :B, 0].sum(axis=0)      # (B,)
    lens_f = y_len.astype(jnp.float32)
    per_b = jnp.where(y_len > 0, per_b_sum / jnp.maximum(lens_f, 1.0), 0.0)
    return jnp.sum(per_b) / jnp.float32(B)


def _reference_loss(y, t, y_len):
    """Pure-JAX replica of the PyTorch forward (for a correctness check)."""
    T, B, _ = y.shape
    total = jnp.float32(0.0)
    for i in range(B):
        L = int(y_len[i])
        if L == 0:
            continue

        def ce(logits, tgt):
            ls = jax.nn.log_softmax(logits.astype(jnp.float32), axis=-1)
            picked = jnp.take_along_axis(ls, tgt[:, None].astype(jnp.int32), axis=1)[:, 0]
            return -jnp.mean(picked)

        total = total + ce(y[:L, i, 0:3], t[:L, i, 0])
        total = total + ce(y[:L, i, 3:5], t[:L, i, 1])
        total = total + ce(y[:L, i, 5:7], t[:L, i, 2])
    return total / B


if __name__ == "__main__":
    key = jax.random.PRNGKey(0)
    k_y, k_t0, k_t1, k_t2 = jax.random.split(key, 4)

    # Small case with a skipped (length-0) batch element and lengths that end
    # mid-tile. Checked both with the auto tile (single tile: T_pad=384) and a
    # forced 128-wide tile (3 time tiles) to exercise the multi-tile path.
    T, B = 300, 4
    y = jax.random.normal(k_y, (T, B, 7), dtype=jnp.float32)
    t_turn = jax.random.randint(k_t0, (T, B, 1), 0, 3, dtype=jnp.int32)
    t_utt = jax.random.randint(k_t1, (T, B, 1), 0, 2, dtype=jnp.int32)
    t_vad = jax.random.randint(k_t2, (T, B, 1), 0, 2, dtype=jnp.int32)
    t = jnp.concatenate([t_turn, t_utt, t_vad], axis=-1)                    # (T, B, 3)
    y_len = jnp.array([300, 140, 0, 37], dtype=jnp.int32)

    ref = _reference_loss(y, t, y_len)

    loss_auto = jax.block_until_ready(turn_utterance_vad_ce_loss(y, t, y_len))
    np.testing.assert_allclose(np.asarray(loss_auto), np.asarray(ref),
                               rtol=1e-4, atol=1e-5)

    loss_multi = jax.block_until_ready(
        turn_utterance_vad_ce_loss(y, t, y_len, time_tile=128))
    np.testing.assert_allclose(np.asarray(loss_multi), np.asarray(ref),
                               rtol=1e-4, atol=1e-5)

    print("KERNEL_OK")
</pallas_src>

<mosaic_0001>
module attributes {stable_mosaic.version = 11 : i64} {
  func.func @_tuv_ce_kernel(%arg0: i32, %arg1: memref<8x1xi32, #tpu.memory_space<vmem>>, %arg2: memref<7x8x384xf32, #tpu.memory_space<vmem>>, %arg3: memref<8x384xi32, #tpu.memory_space<vmem>>, %arg4: memref<8x128xf32, #tpu.memory_space<vmem>>) attributes {dimension_semantics = [#tpu.dimension_semantics<parallel>], iteration_bounds = array<i64: 1>, scalar_prefetch = 0 : i64, scratch_operands = 0 : i64, tpu.core_type = #tpu.core_type<tc>, window_params = [{pipeline_mode = #tpu.pipeline_mode<synchronous>, transform_indices = @transform_0, window_bounds = array<i64: 8, 1>}, {transform_indices = @transform_1, window_bounds = array<i64: 7, 8, 384>}, {transform_indices = @transform_2, window_bounds = array<i64: 8, 384>}, {transform_indices = @transform_3, window_bounds = array<i64: 8, 128>}]} {
    %c0 = arith.constant 0 : index
    %c0_0 = arith.constant 0 : index
    %0 = vector.load %arg1[%c0, %c0_0] : memref<8x1xi32, #tpu.memory_space<vmem>>, vector<8x1xi32>
    %c384_i32 = arith.constant 384 : i32
    %1 = arith.muli %arg0, %c384_i32 : i32
    %2 = tpu.iota {dimensions = array<i32: 1>} : vector<8x384xi32>
    %3 = vector.broadcast %1 : i32 to vector<8x384xi32>
    %4 = arith.addi %3, %2 : vector<8x384xi32>
    %5 = vector.broadcast %0 : vector<8x1xi32> to vector<8x384xi32>
    %6 = arith.cmpi slt, %4, %5 : vector<8x384xi32>
    %7 = arith.extui %6 : vector<8x384xi1> to vector<8x384xi32>
    %8 = arith.sitofp %7 : vector<8x384xi32> to vector<8x384xf32>
    %c0_1 = arith.constant 0 : index
    %c0_2 = arith.constant 0 : index
    %9 = vector.load %arg3[%c0_1, %c0_2] : memref<8x384xi32, #tpu.memory_space<vmem>>, vector<8x384xi32>
    %c3_i32 = arith.constant 3 : i32
    %10 = vector.broadcast %c3_i32 : i32 to vector<8x384xi32>
    %11 = arith.andi %9, %10 : vector<8x384xi32>
    %c2_i32 = arith.constant 2 : i32
    %12 = vector.broadcast %c2_i32 : i32 to vector<8x384xi32>
    %13 = arith.shrsi %9, %12 : vector<8x384xi32>
    %c1_i32 = arith.constant 1 : i32
    %14 = vector.broadcast %c1_i32 : i32 to vector<8x384xi32>
    %15 = arith.andi %13, %14 : vector<8x384xi32>
    %c3_i32_3 = arith.constant 3 : i32
    %16 = vector.broadcast %c3_i32_3 : i32 to vector<8x384xi32>
    %17 = arith.shrsi %9, %16 : vector<8x384xi32>
    %c1_i32_4 = arith.constant 1 : i32
    %18 = vector.broadcast %c1_i32_4 : i32 to vector<8x384xi32>
    %19 = arith.andi %17, %18 : vector<8x384xi32>
    %c0_5 = arith.constant 0 : index
    %c0_6 = arith.constant 0 : index
    %c0_7 = arith.constant 0 : index
    %20 = vector.load %arg2[%c0_5, %c0_6, %c0_7] : memref<7x8x384xf32, #tpu.memory_space<vmem>>, vector<1x8x384xf32>
    %21 = vector.shape_cast %20 : vector<1x8x384xf32> to vector<8x384xf32>
    %c1 = arith.constant 1 : index
    %c0_8 = arith.constant 0 : index
    %c0_9 = arith.constant 0 : index
    %22 = vector.load %arg2[%c1, %c0_8, %c0_9] : memref<7x8x384xf32, #tpu.memory_space<vmem>>, vector<1x8x384xf32>
    %23 = vector.shape_cast %22 : vector<1x8x384xf32> to vector<8x384xf32>
    %c2 = arith.constant 2 : index
    %c0_10 = arith.constant 0 : index
    %c0_11 = arith.constant 0 : index
    %24 = vector.load %arg2[%c2, %c0_10, %c0_11] : memref<7x8x384xf32, #tpu.memory_space<vmem>>, vector<1x8x384xf32>
    %25 = vector.shape_cast %24 : vector<1x8x384xf32> to vector<8x384xf32>
    %c3 = arith.constant 3 : index
    %c0_12 = arith.constant 0 : index
    %c0_13 = arith.constant 0 : index
    %26 = vector.load %arg2[%c3, %c0_12, %c0_13] : memref<7x8x384xf32, #tpu.memory_space<vmem>>, vector<1x8x384xf32>
    %27 = vector.shape_cast %26 : vector<1x8x384xf32> to vector<8x384xf32>
    %c4 = arith.constant 4 : index
    %c0_14 = arith.constant 0 : index
    %c0_15 = arith.constant 0 : index
    %28 = vector.load %arg2[%c4, %c0_14, %c0_15] : memref<7x8x384xf32, #tpu.memory_space<vmem>>, vector<1x8x384xf32>
    %29 = vector.shape_cast %28 : vector<1x8x384xf32> to vector<8x384xf32>
    %c5 = arith.constant 5 : index
    %c0_16 = arith.constant 0 : index
    %c0_17 = arith.constant 0 : index
    %30 = vector.load %arg2[%c5, %c0_16, %c0_17] : memref<7x8x384xf32, #tpu.memory_space<vmem>>, vector<1x8x384xf32>
    %31 = vector.shape_cast %30 : vector<1x8x384xf32> to vector<8x384xf32>
    %c6 = arith.constant 6 : index
    %c0_18 = arith.constant 0 : index
    %c0_19 = arith.constant 0 : index
    %32 = vector.load %arg2[%c6, %c0_18, %c0_19] : memref<7x8x384xf32, #tpu.memory_space<vmem>>, vector<1x8x384xf32>
    %33 = vector.shape_cast %32 : vector<1x8x384xf32> to vector<8x384xf32>
    %34 = arith.maximumf %21, %23 : vector<8x384xf32>
    %35 = arith.maximumf %34, %25 : vector<8x384xf32>
    %36 = arith.minimumf %21, %23 : vector<8x384xf32>
    %37 = arith.minimumf %36, %25 : vector<8x384xf32>
    %38 = arith.minimumf %21, %23 : vector<8x384xf32>
    %39 = arith.maximumf %21, %23 : vector<8x384xf32>
    %40 = arith.minimumf %39, %25 : vector<8x384xf32>
    %41 = arith.maximumf %38, %40 : vector<8x384xf32>
    %42 = arith.subf %41, %35 : vector<8x384xf32>
    %43 = math.exp %42 : vector<8x384xf32>
    %cst = arith.constant 1.000000e+00 : f32
    %44 = vector.broadcast %cst : f32 to vector<8x384xf32>
    %45 = arith.addf %44, %43 : vector<8x384xf32>
    %46 = arith.subf %37, %35 : vector<8x384xf32>
    %47 = math.exp %46 : vector<8x384xf32>
    %48 = arith.addf %45, %47 : vector<8x384xf32>
    %c0_i32 = arith.constant 0 : i32
    %49 = vector.broadcast %c0_i32 : i32 to vector<8x384xi32>
    %50 = arith.cmpi eq, %11, %49 : vector<8x384xi32>
    %c1_i32_20 = arith.constant 1 : i32
    %51 = vector.broadcast %c1_i32_20 : i32 to vector<8x384xi32>
    %52 = arith.cmpi eq, %11, %51 : vector<8x384xi32>
    %53 = arith.select %52, %23, %25 : vector<8x384xi1>, vector<8x384xf32>
    %54 = arith.select %50, %21, %53 : vector<8x384xi1>, vector<8x384xf32>
    %c0_i32_21 = arith.constant 0 : i32
    %55 = vector.broadcast %c0_i32_21 : i32 to vector<8x384xi32>
    %56 = arith.cmpi eq, %15, %55 : vector<8x384xi32>
    %57 = arith.subf %27, %29 : vector<8x384xf32>
    %58 = arith.subf %29, %27 : vector<8x384xf32>
    %59 = arith.select %56, %57, %58 : vector<8x384xi1>, vector<8x384xf32>
    %cst_22 = arith.constant 0.000000e+00 : f32
    %60 = vector.broadcast %cst_22 : f32 to vector<8x384xf32>
    %61 = arith.subf %60, %59 : vector<8x384xf32>
    %cst_23 = arith.constant 0.000000e+00 : f32
    %62 = vector.broadcast %cst_23 : f32 to vector<8x384xf32>
    %63 = arith.maximumf %61, %62 : vector<8x384xf32>
    %64 = math.absf %59 : vector<8x384xf32>
    %cst_24 = arith.constant 0.000000e+00 : f32
    %65 = vector.broadcast %cst_24 : f32 to vector<8x384xf32>
    %66 = arith.subf %65, %64 : vector<8x384xf32>
    %67 = math.exp %66 : vector<8x384xf32>
    %cst_25 = arith.constant 1.000000e+00 : f32
    %68 = vector.broadcast %cst_25 : f32 to vector<8x384xf32>
    %69 = arith.addf %68, %67 : vector<8x384xf32>
    %c0_i32_26 = arith.constant 0 : i32
    %70 = vector.broadcast %c0_i32_26 : i32 to vector<8x384xi32>
    %71 = arith.cmpi eq, %19, %70 : vector<8x384xi32>
    %72 = arith.subf %31, %33 : vector<8x384xf32>
    %73 = arith.subf %33, %31 : vector<8x384xf32>
    %74 = arith.select %71, %72, %73 : vector<8x384xi1>, vector<8x384xf32>
    %cst_27 = arith.constant 0.000000e+00 : f32
    %75 = vector.broadcast %cst_27 : f32 to vector<8x384xf32>
    %76 = arith.subf %75, %74 : vector<8x384xf32>
    %cst_28 = arith.constant 0.000000e+00 : f32
    %77 = vector.broadcast %cst_28 : f32 to vector<8x384xf32>
    %78 = arith.maximumf %76, %77 : vector<8x384xf32>
    %79 = math.absf %74 : vector<8x384xf32>
    %cst_29 = arith.constant 0.000000e+00 : f32
    %80 = vector.broadcast %cst_29 : f32 to vector<8x384xf32>
    %81 = arith.subf %80, %79 : vector<8x384xf32>
    %82 = math.exp %81 : vector<8x384xf32>
    %cst_30 = arith.constant 1.000000e+00 : f32
    %83 = vector.broadcast %cst_30 : f32 to vector<8x384xf32>
    %84 = arith.addf %83, %82 : vector<8x384xf32>
    %85 = arith.subf %35, %54 : vector<8x384xf32>
    %86 = arith.addf %85, %63 : vector<8x384xf32>
    %87 = arith.addf %86, %78 : vector<8x384xf32>
    %88 = arith.mulf %48, %69 : vector<8x384xf32>
    %89 = arith.mulf %88, %84 : vector<8x384xf32>
    %90 = math.log %89 : vector<8x384xf32>
    %91 = arith.addf %87, %90 : vector<8x384xf32>
    %92 = arith.mulf %91, %8 : vector<8x384xf32>
    %cst_31 = arith.constant dense<0.000000e+00> : vector<8xf32>
    %93 = vector.multi_reduction <add>, %92, %cst_31 [1] : vector<8x384xf32> to vector<8xf32>
    %94 = vector.shape_cast %93 : vector<8xf32> to vector<8x1xf32>
    %95 = vector.shape_cast %94 : vector<8x1xf32> to vector<8x1xf32>
    %96 = vector.broadcast %95 : vector<8x1xf32> to vector<8x128xf32>
    %c0_32 = arith.constant 0 : index
    %c0_33 = arith.constant 0 : index
    %97 = vector.load %arg4[%c0_32, %c0_33] : memref<8x128xf32, #tpu.memory_space<vmem>>, vector<8x128xf32>
    tpu.vector_store %arg4[%c0_32, %c0_33], %96 {strides = array<i32>} : memref<8x128xf32, #tpu.memory_space<vmem>>, vector<8x128xf32>,
    return
  }
  func.func @transform_0(%arg0: i32) -> (i32, i32) {
    %c0_i32 = arith.constant 0 : i32
    %c0_i32_0 = arith.constant 0 : i32
    %c0_i32_1 = arith.constant 0 : i32
    return %c0_i32, %c0_i32_0 : i32, i32
  }
  func.func @transform_1(%arg0: i32) -> (i32, i32, i32) {
    %c0_i32 = arith.constant 0 : i32
    %c0_i32_0 = arith.constant 0 : i32
    %c0_i32_1 = arith.constant 0 : i32
    return %c0_i32, %c0_i32_0, %arg0 : i32, i32, i32
  }
  func.func @transform_2(%arg0: i32) -> (i32, i32) {
    %c0_i32 = arith.constant 0 : i32
    %c0_i32_0 = arith.constant 0 : i32
    return %c0_i32, %arg0 : i32, i32
  }
  func.func @transform_3(%arg0: i32) -> (i32, i32) {
    %c0_i32 = arith.constant 0 : i32
    %c0_i32_0 = arith.constant 0 : i32
    return %arg0, %c0_i32 : i32, i32
  }
}

</mosaic_0001>

<llo_original>
// kernel: turn_utterance_vad_ce_loss.1
$region0: #{turn_utterance_vad_ce_loss.1}
  #allocation0 [shape = 'u32[]', space=smem, size = 0x4, offset = 0x4, fixed_abs, tag = 'smem constant byte address 0x4 - core index']
  #allocation1 [shape = 'u32[144,128]{1,0:T(1,128)}', space=vmem, size = 0x12000, scoped, tag = 'internal scratch']
  %s0 = inlined_call_operand.vmem [shape: s32[8,1], index: 0, kind: input, shape index: {}]
  %s1 = inlined_call_operand.vmem [shape: f32[7,8,384], index: 1, kind: input, shape index: {}]
  %s2 = inlined_call_operand.vmem [shape: s32[8,384], index: 2, kind: input, shape index: {}]
  %s3 = inlined_call_operand.vmem [shape: f32[8,128], index: 3, kind: output, shape index: {}]
  %s4 = sld [smem:[#allocation0]]
  $region22: #{turn_utterance_vad_ce_loss.1} parent=0
    _
  %s6 = ssub.s32 1, %s4
  %s7 = scalar_select 0, %s6, %s4
  // Predicated region
  $region2: #{turn_utterance_vad_ce_loss.1} parent=0 // pred_check
    _
  $region3: #{turn_utterance_vad_ce_loss.1} parent=0 // pred_check_branch
    %9 = sbr.rel (0) target = $region5
  $region4: #{turn_utterance_vad_ce_loss.1} parent=0 // pred_region
    _
  $region5: #{turn_utterance_vad_ce_loss.1} parent=0 // pred_fallthru
    _
  // Predicated region
  $region6: #{turn_utterance_vad_ce_loss.1} parent=0 // pred_check
    _
  $region7: #{turn_utterance_vad_ce_loss.1} parent=0 // pred_check_branch
    %11 = sbr.rel (0) target = $region9
  $region8: #{turn_utterance_vad_ce_loss.1} parent=0 // pred_region
    _
  $region9: #{turn_utterance_vad_ce_loss.1} parent=0 // pred_fallthru
    _
  // Predicated region
  $region10: #{turn_utterance_vad_ce_loss.1} parent=0 // pred_check
    _
  $region11: #{turn_utterance_vad_ce_loss.1} parent=0 // pred_check_branch
    %13 = sbr.rel (0) target = $region13
  $region12: #{turn_utterance_vad_ce_loss.1} parent=0 // pred_region
    _
  $region13: #{turn_utterance_vad_ce_loss.1} parent=0 // pred_fallthru
    _
  %v14 = vld [vmem:[%s0] sm:$0xff]
  %s15 = smul.u32 0, 384
  %v16 = vlaneseq
  %v17 = vand.u32 %v16, 127
  %v18 = vadd.s32 %v17, 128
  %v19 = vadd.s32 %v17, 256
  %v20 = vstv %s15
  %v21 = vadd.s32 %v20, %v17
  %v22 = vadd.s32 %v20, %v18
  %v23 = vadd.s32 %v20, %v19
  %24 = vset.pattern.permute.xlu0 0
  %25 = vperm.xlu0 %24, %v14
  %v26 = vpop.permute.xlu0 %25
  %vm27 = vcmp.lt.s32.totalorder %v21, %v26
  %vm28 = vcmp.lt.s32.totalorder %v22, %v26
  %vm29 = vcmp.lt.s32.totalorder %v23, %v26
  %v30 = vsel %vm27, 1, 0
  %v31 = vsel %vm28, 1, 0
  %v32 = vsel %vm29, 1, 0
  %v33 = vcvt.s32.f32 %v30
  %v34 = vcvt.s32.f32 %v31
  %v35 = vcvt.s32.f32 %v32
  %v36 = vld [vmem:[%s2] sm:$0xff]
  %v37 = vld [vmem:[%s2 + $0x8] sm:$0xff]
  %v38 = vld [vmem:[%s2 + $0x10] sm:$0xff]
  %v39 = vand.u32 %v36, 3
  %v40 = vand.u32 %v37, 3
  %v41 = vand.u32 %v38, 3
  %v42 = vshra.s32 %v36, 2
  %v43 = vshra.s32 %v37, 2
  %v44 = vshra.s32 %v38, 2
  %v45 = vand.u32 %v42, 1
  %v46 = vand.u32 %v43, 1
  %v47 = vand.u32 %v44, 1
  %v48 = vshra.s32 %v36, 3
  %v49 = vshra.s32 %v37, 3
  %v50 = vshra.s32 %v38, 3
  %v51 = vand.u32 %v48, 1
  %v52 = vand.u32 %v49, 1
  %v53 = vand.u32 %v50, 1
  %v54 = vld [vmem:[%s1] sm:$0xff]
  %v55 = vld [vmem:[%s1 + $0x8] sm:$0xff]
  %v56 = vld [vmem:[%s1 + $0x10] sm:$0xff]
  %s57 = scalar_lea.vmem %s1, 24
  %v58 = vld [vmem:[%s57] sm:$0xff]
  %v59 = vld [vmem:[%s57 + $0x8] sm:$0xff]
  %v60 = vld [vmem:[%s57 + $0x10] sm:$0xff]
  %s61 = scalar_lea.vmem %s1, 48
  %v62 = vld [vmem:[%s61] sm:$0xff]
  %v63 = vld [vmem:[%s61 + $0x8] sm:$0xff]
  %v64 = vld [vmem:[%s61 + $0x10] sm:$0xff]
  %s65 = scalar_lea.vmem %s1, 72
  %v66 = vld [vmem:[%s65] sm:$0xff]
  %v67 = vld [vmem:[%s65 + $0x8] sm:$0xff]
  %v68 = vld [vmem:[%s65 + $0x10] sm:$0xff]
  %s69 = scalar_lea.vmem %s1, 96
  %v70 = vld [vmem:[%s69] sm:$0xff]
  %v71 = vld [vmem:[%s69 + $0x8] sm:$0xff]
  %v72 = vld [vmem:[%s69 + $0x10] sm:$0xff]
  %s73 = scalar_lea.vmem %s1, 120
  %v74 = vld [vmem:[%s73] sm:$0xff]
  %v75 = vld [vmem:[%s73 + $0x8] sm:$0xff]
  %v76 = vld [vmem:[%s73 + $0x10] sm:$0xff]
  %s77 = scalar_lea.vmem %s1, 144
  %v78 = vld [vmem:[%s77] sm:$0xff]
  %v79 = vld [vmem:[%s77 + $0x8] sm:$0xff]
  %v80 = vld [vmem:[%s77 + $0x10] sm:$0xff]
  %v81 = vmax.f32 %v54, %v58
  %v82 = vmax.f32 %v55, %v59
  %v83 = vmax.f32 %v56, %v60
  %v84 = vmax.f32 %v81, %v62
  %v85 = vmax.f32 %v82, %v63
  %v86 = vmax.f32 %v83, %v64
  %v87 = vmin.f32 %v54, %v58
  %v88 = vmin.f32 %v55, %v59
  %v89 = vmin.f32 %v56, %v60
  %v90 = vmin.f32 %v87, %v62
  %v91 = vmin.f32 %v88, %v63
  %v92 = vmin.f32 %v89, %v64
  %v93 = vmin.f32 %v81, %v62
  %v94 = vmin.f32 %v82, %v63
  %v95 = vmin.f32 %v83, %v64
  %v96 = vmax.f32 %v87, %v93
  %v97 = vmax.f32 %v88, %v94
  %v98 = vmax.f32 %v89, %v95
  %v99 = vsub.f32 %v96, %v84
  %v100 = vsub.f32 %v97, %v85
  %v101 = vsub.f32 %v98, %v86
  %v102 = vmul.f32 %v99, 1.442695
  %v103 = vpow.pop %v102
  %v104 = vmul.f32 %v100, 1.442695
  %v105 = vpow.pop %v104
  %v106 = vmul.f32 %v101, 1.442695
  %v107 = vpow.pop %v106
  %v108 = vadd.f32 %v103, 1.0
  %v109 = vadd.f32 %v105, 1.0
  %v110 = vadd.f32 %v107, 1.0
  %v111 = vsub.f32 %v90, %v84
  %v112 = vsub.f32 %v91, %v85
  %v113 = vsub.f32 %v92, %v86
  %v114 = vmul.f32 %v111, 1.442695
  %v115 = vpow.pop %v114
  %v116 = vmul.f32 %v112, 1.442695
  %v117 = vpow.pop %v116
  %v118 = vmul.f32 %v113, 1.442695
  %v119 = vpow.pop %v118
  %v120 = vadd.f32 %v108, %v115
  %v121 = vadd.f32 %v109, %v117
  %v122 = vadd.f32 %v110, %v119
  %vm123 = vcmp.eq.s32.totalorder %v39, 0
  %vm124 = vcmp.eq.s32.totalorder %v40, 0
  %vm125 = vcmp.eq.s32.totalorder %v41, 0
  %vm126 = vcmp.eq.s32.totalorder %v39, 1
  %vm127 = vcmp.eq.s32.totalorder %v40, 1
  %vm128 = vcmp.eq.s32.totalorder %v41, 1
  %v129 = vsel %vm126, %v58, %v62
  %v130 = vsel %vm127, %v59, %v63
  %v131 = vsel %vm128, %v60, %v64
  %v132 = vsel %vm123, %v54, %v129
  %v133 = vsel %vm124, %v55, %v130
  %v134 = vsel %vm125, %v56, %v131
  %vm135 = vcmp.eq.s32.totalorder %v45, 0
  %vm136 = vcmp.eq.s32.totalorder %v46, 0
  %vm137 = vcmp.eq.s32.totalorder %v47, 0
  %v138 = vsub.f32 %v66, %v70
  %v139 = vsub.f32 %v67, %v71
  %v140 = vsub.f32 %v68, %v72
  %v141 = vsub.f32 %v70, %v66
  %v142 = vsub.f32 %v71, %v67
  %v143 = vsub.f32 %v72, %v68
  %v144 = vsel %vm135, %v138, %v141
  %v145 = vsel %vm136, %v139, %v142
  %v146 = vsel %vm137, %v140, %v143
  %v147 = vsub.f32 0.0, %v144
  %v148 = vsub.f32 0.0, %v145
  %v149 = vsub.f32 0.0, %v146
  %v150 = vmax.f32 %v147, 0.0
  %v151 = vmax.f32 %v148, 0.0
  %v152 = vmax.f32 %v149, 0.0
  %v153 = vand.u32 2147483647, %v144
  %v154 = vand.u32 2147483647, %v145
  %v155 = vand.u32 2147483647, %v146
  %v156 = vsub.f32 0.0, %v153
  %v157 = vsub.f32 0.0, %v154
  %v158 = vsub.f32 0.0, %v155
  %v159 = vmul.f32 %v156, 1.442695
  %v160 = vpow.pop %v159
  %v161 = vmul.f32 %v157, 1.442695
  %v162 = vpow.pop %v161
  %v163 = vmul.f32 %v158, 1.442695
  %v164 = vpow.pop %v163
  %v165 = vadd.f32 %v160, 1.0
  %v166 = vadd.f32 %v162, 1.0
  %v167 = vadd.f32 %v164, 1.0
  %vm168 = vcmp.eq.s32.totalorder %v51, 0
  %vm169 = vcmp.eq.s32.totalorder %v52, 0
  %vm170 = vcmp.eq.s32.totalorder %v53, 0
  %v171 = vsub.f32 %v74, %v78
  %v172 = vsub.f32 %v75, %v79
  %v173 = vsub.f32 %v76, %v80
  %v174 = vsub.f32 %v78, %v74
  %v175 = vsub.f32 %v79, %v75
  %v176 = vsub.f32 %v80, %v76
  %v177 = vsel %vm168, %v171, %v174
  %v178 = vsel %vm169, %v172, %v175
  %v179 = vsel %vm170, %v173, %v176
  %v180 = vsub.f32 0.0, %v177
  %v181 = vsub.f32 0.0, %v178
  %v182 = vsub.f32 0.0, %v179
  %v183 = vmax.f32 %v180, 0.0
  %v184 = vmax.f32 %v181, 0.0
  %v185 = vmax.f32 %v182, 0.0
  %v186 = vand.u32 2147483647, %v177
  %v187 = vand.u32 2147483647, %v178
  %v188 = vand.u32 2147483647, %v179
  %v189 = vsub.f32 0.0, %v186
  %v190 = vsub.f32 0.0, %v187
  %v191 = vsub.f32 0.0, %v188
  %v192 = vmul.f32 %v189, 1.442695
  %v193 = vpow.pop %v192
  %v194 = vmul.f32 %v190, 1.442695
  %v195 = vpow.pop %v194
  %v196 = vmul.f32 %v191, 1.442695
  %v197 = vpow.pop %v196
  %v198 = vadd.f32 %v193, 1.0
  %v199 = vadd.f32 %v195, 1.0
  %v200 = vadd.f32 %v197, 1.0
  %v201 = vsub.f32 %v84, %v132
  %v202 = vsub.f32 %v85, %v133
  %v203 = vsub.f32 %v86, %v134
  %v204 = vadd.f32 %v201, %v150
  %v205 = vadd.f32 %v202, %v151
  %v206 = vadd.f32 %v203, %v152
  %v207 = vadd.f32 %v204, %v183
  %v208 = vadd.f32 %v205, %v184
  %v209 = vadd.f32 %v206, %v185
  %v210 = vmul.f32 %v120, %v165
  %v211 = vmul.f32 %v121, %v166
  %v212 = vmul.f32 %v122, %v167
  %v213 = vmul.f32 %v210, %v198
  %v214 = vmul.f32 %v211, %v199
  %v215 = vmul.f32 %v212, %v200
  %v216 = vlog2.pop %v213
  %v217 = vmul.f32 %v216, 0.6931472
  %v218 = vlog2.pop %v214
  %v219 = vmul.f32 %v218, 0.6931472
  %v220 = vlog2.pop %v215
  %v221 = vmul.f32 %v220, 0.6931472
  %v222 = vadd.f32 %v207, %v217
  %v223 = vadd.f32 %v208, %v219
  %v224 = vadd.f32 %v209, %v221
  %v225 = vmul.f32 %v222, %v33
  %v226 = vmul.f32 %v223, %v34
  %v227 = vmul.f32 %v224, %v35
  %v228 = vadd.f32 %v225, %v226
  %v229 = vadd.f32 %v228, %v227
  %230 = vadd.xlane.f32.xlu0 %v229
  %v231 = vpop.xlane.xlu0 %230
  %232 = vst [vmem:[%s3] sm:$0xff] %v231
  // Predicated region
  $region14: #{turn_utterance_vad_ce_loss.1} parent=0 // pred_check
    _
  $region15: #{turn_utterance_vad_ce_loss.1} parent=0 // pred_check_branch
    %234 = sbr.rel (0) target = $region17
  $region16: #{turn_utterance_vad_ce_loss.1} parent=0 // pred_region
    _
  $region17: #{turn_utterance_vad_ce_loss.1} parent=0 // pred_fallthru
    _
  // Predicated region
  $region18: #{turn_utterance_vad_ce_loss.1} parent=0 // pred_check
    _
  $region19: #{turn_utterance_vad_ce_loss.1} parent=0 // pred_check_branch
    %236 = sbr.rel (0) target = $region21
  $region20: #{turn_utterance_vad_ce_loss.1} parent=0 // pred_region
    _
  $region21: #{turn_utterance_vad_ce_loss.1} parent=0 // pred_fallthru
    _

</llo_original>
